<compile_context>
chip_gen: v7x
topology: tpu7x:2x2x1
jax: 0.10.0
libtpu: 0.0.40
codegen_flags: <defaults>
</compile_context>

<pallas_src>
import jax
import jax.numpy as jnp
from jax.experimental import pallas as pl
from jax.experimental.pallas import tpu as pltpu


def _scaled_silu_kernel(x_ref, inv_s_ref, o_ref):
    """y = silu(x) * inv_scales on one (TR, H) block, computed in f32."""
    x = x_ref[...].astype(jnp.float32)          # (TR, H)
    inv_s = inv_s_ref[...]                      # (1, H), f32 -> broadcasts
    # Single-EUP SiLU: x * sigmoid(x) == 0.5 * x * (1 + tanh(0.5 * x))
    act = 0.5 * x * (1.0 + jnp.tanh(0.5 * x))
    o_ref[...] = (act * inv_s).astype(o_ref.dtype)


def _choose_row_tile(num_rows, hidden, itemsize, block_budget_bytes):
    """Row-tile size: ~2 MiB blocks (streaming plateau), within VMEM budget."""
    bytes_per_row = hidden * itemsize
    # Budget covers input block + output block, each double-buffered -> 4x.
    max_rows = max(8, block_budget_bytes // (4 * bytes_per_row))
    # ~2 MiB per block is comfortably past the measured HBM-streaming plateau;
    # bigger tiles only add VMEM pressure with no bandwidth gain.
    target_rows = max(8, (2 * 1024 * 1024) // bytes_per_row)
    rows = min(max_rows, target_rows)
    if rows >= num_rows:
        return num_rows                          # full extent: always legal
    # Second-to-last block dim must be a multiple of 8 (sublane) if not full.
    return max(8, (rows // 8) * 8)


def scaled_activation(x, scales):
    """x: (B, S, H), scales: (H,). Returns silu(x) / scales[None, None, :]."""
    B, S, H = x.shape
    R = B * S

    # Flatten leading dims: H stays innermost so this is layout-free, and the
    # block size no longer depends on how rows split between B and S.
    x2 = x.reshape(R, H)

    # Hoisted, exact f32 reciprocal of the tiny (H,) scales vector; the kernel
    # multiplies in f32 so there is no double-rounding vs a true f32 divide.
    inv_scales = (1.0 / scales.astype(jnp.float32)).reshape(1, H)

    # Size VMEM usage from the hardware instead of hard-coding: keep the
    # Pallas-managed blocks within half the scoped limit and the scoped limit
    # at half of physical VMEM (leaves >=16 MiB compiler headroom on v7x).
    try:
        vmem_cap = pltpu.get_tpu_info().vmem_capacity_bytes
    except Exception:  # pragma: no cover - conservative fallback
        vmem_cap = 64 * 1024 * 1024
    vmem_limit = vmem_cap // 2
    block_budget = vmem_limit // 2

    TR = _choose_row_tile(R, H, x.dtype.itemsize, block_budget)
    grid = (pl.cdiv(R, TR),)

    out2 = pl.pallas_call(
        _scaled_silu_kernel,
        out_shape=jax.ShapeDtypeStruct((R, H), x.dtype),
        grid_spec=pltpu.PrefetchScalarGridSpec(
            num_scalar_prefetch=0,
            grid=grid,
            in_specs=[
                # one (TR, H) row tile of x per grid step; H is lane-dense
                pl.BlockSpec((TR, H), lambda i: (i, 0)),
                # inv_scales: same tiny f32 block every step (stays resident)
                pl.BlockSpec((1, H), lambda i: (0, 0)),
            ],
            out_specs=pl.BlockSpec((TR, H), lambda i: (i, 0)),
        ),
        compiler_params=pltpu.CompilerParams(
            # independent row tiles -> shard across TCs on v7x
            dimension_semantics=("parallel",),
            vmem_limit_bytes=vmem_limit,
        ),
    )(x2, inv_scales)

    return out2.reshape(B, S, H)


def _reference(x, scales):
    xf = x.astype(jnp.float32)
    act = xf * jax.nn.sigmoid(xf)
    return (act / scales.astype(jnp.float32)[None, None, :]).astype(x.dtype)


if __name__ == "__main__":
    key = jax.random.PRNGKey(0)
    kx, ks = jax.random.split(key)

    # Small but lane-dense shapes: H is a multiple of 128 so stores are
    # unmasked vst.
    B, S, H = 2, 8, 128
    x = jax.random.normal(kx, (B, S, H), dtype=jnp.float32)
    # Deterministic, strictly-positive scales (avoid division by ~0).
    scales = jax.random.uniform(ks, (H,), dtype=jnp.float32,
                                minval=0.5, maxval=1.5)

    out = scaled_activation(x, scales)
    out = jax.block_until_ready(out)

    ref = _reference(x, scales)
    assert out.shape == (B, S, H)
    assert jnp.allclose(out, ref, atol=1e-5, rtol=1e-5), "mismatch vs reference"

    print("KERNEL_OK")
</pallas_src>

<mosaic_0001>
module attributes {stable_mosaic.version = 11 : i64} {
  func.func @_scaled_silu_kernel(%arg0: i32, %arg1: memref<16x128xf32, #tpu.memory_space<vmem>>, %arg2: memref<1x128xf32, #tpu.memory_space<vmem>>, %arg3: memref<16x128xf32, #tpu.memory_space<vmem>>) attributes {dimension_semantics = [#tpu.dimension_semantics<parallel>], iteration_bounds = array<i64: 1>, scalar_prefetch = 0 : i64, scratch_operands = 0 : i64, tpu.core_type = #tpu.core_type<tc>, window_params = [{transform_indices = @transform_0, window_bounds = array<i64: 16, 128>}, {pipeline_mode = #tpu.pipeline_mode<synchronous>, transform_indices = @transform_1, window_bounds = array<i64: 1, 128>}, {transform_indices = @transform_2, window_bounds = array<i64: 16, 128>}]} {
    %c0 = arith.constant 0 : index
    %c0_0 = arith.constant 0 : index
    %0 = vector.load %arg1[%c0, %c0_0] : memref<16x128xf32, #tpu.memory_space<vmem>>, vector<16x128xf32>
    %c0_1 = arith.constant 0 : index
    %c0_2 = arith.constant 0 : index
    %1 = vector.load %arg2[%c0_1, %c0_2] : memref<1x128xf32, #tpu.memory_space<vmem>>, vector<1x128xf32>
    %cst = arith.constant 5.000000e-01 : f32
    %2 = vector.broadcast %cst : f32 to vector<16x128xf32>
    %3 = arith.mulf %2, %0 : vector<16x128xf32>
    %cst_3 = arith.constant 5.000000e-01 : f32
    %4 = vector.broadcast %cst_3 : f32 to vector<16x128xf32>
    %5 = arith.mulf %4, %0 : vector<16x128xf32>
    %6 = math.tanh %5 : vector<16x128xf32>
    %cst_4 = arith.constant 1.000000e+00 : f32
    %7 = vector.broadcast %cst_4 : f32 to vector<16x128xf32>
    %8 = arith.addf %7, %6 : vector<16x128xf32>
    %9 = arith.mulf %3, %8 : vector<16x128xf32>
    %10 = vector.broadcast %1 : vector<1x128xf32> to vector<16x128xf32>
    %11 = arith.mulf %9, %10 : vector<16x128xf32>
    %c0_5 = arith.constant 0 : index
    %c0_6 = arith.constant 0 : index
    %12 = vector.load %arg3[%c0_5, %c0_6] : memref<16x128xf32, #tpu.memory_space<vmem>>, vector<16x128xf32>
    tpu.vector_store %arg3[%c0_5, %c0_6], %11 {strides = array<i32>} : memref<16x128xf32, #tpu.memory_space<vmem>>, vector<16x128xf32>,
    return
  }
  func.func @transform_0(%arg0: i32) -> (i32, i32) {
    %c0_i32 = arith.constant 0 : i32
    %c0_i32_0 = arith.constant 0 : i32
    return %arg0, %c0_i32 : i32, i32
  }
  func.func @transform_1(%arg0: i32) -> (i32, i32) {
    %c0_i32 = arith.constant 0 : i32
    %c0_i32_0 = arith.constant 0 : i32
    %c0_i32_1 = arith.constant 0 : i32
    return %c0_i32, %c0_i32_0 : i32, i32
  }
  func.func @transform_2(%arg0: i32) -> (i32, i32) {
    %c0_i32 = arith.constant 0 : i32
    %c0_i32_0 = arith.constant 0 : i32
    return %arg0, %c0_i32 : i32, i32
  }
}

</mosaic_0001>

<llo_original>
// kernel: tpu_custom_call.1
$region0: #{tpu_custom_call.1}
  #allocation0 [shape = 'u32[]', space=smem, size = 0x4, offset = 0x4, fixed_abs, tag = 'smem constant byte address 0x4 - core index']
  #allocation1 [shape = 'u32[144,128]{1,0:T(1,128)}', space=vmem, size = 0x12000, scoped, tag = 'internal scratch']
  %s0 = inlined_call_operand.hbm [shape: f32[16,128], index: 0, kind: input, shape index: {}]
  %s1 = inlined_call_operand.vmem [shape: f32[1,128], index: 1, kind: input, shape index: {}]
  %s2 = inlined_call_operand.hbm [shape: f32[16,128], index: 2, kind: output, shape index: {}]
  %s3 = sld [smem:[#allocation0]]
  $region22: #{tpu_custom_call.1} parent=0
    _
  %s5 = ssub.s32 1, %s3
  %s6 = scalar_select 0, %s5, %s3
  $region1: #{tpu_custom_call.1} parent=0
    #allocation2 [shape = 'u8[8192]{0}', space=vmem, size = 0x2000, scoped, tag = 'input window, operand 0, single buffered']
    #allocation3 [shape = 's32[1]{0}', space=sflag, size = 0x4, scoped, tag = 'scoped memory for tpu_custom_call.1']
    #allocation4 [shape = 's32[1]{0}', space=sflag, size = 0x4, scoped, tag = 'scoped memory for tpu_custom_call.1']
    #allocation5 [shape = 'u8[8192]{0}', space=vmem, size = 0x2000, scoped, tag = 'output window, operand 0, single buffered']
    %7 = vsyncpa [#allocation3], 0
    %8 = vsyncpa [#allocation4], 0
    // Predicated region
    $region2: #{tpu_custom_call.1} parent=1 // pred_check
      _
    $region3: #{tpu_custom_call.1} parent=1 // pred_check_branch
      %10 = sbr.rel (0) target = $region5
    $region4: #{tpu_custom_call.1} parent=1 // pred_region
      %s12 = ssub.s32 256, 256
      %13 = vsyncadd [#allocation3], %s12
      %s14 = sshll.u32 [#allocation2], 4
      %s15 = int_to_ptr.vmem [resolvable:$true] %s14
      %20 = dma.hbm_to_vmem [thread:$0]  %s0, 256, %s15, [#allocation3], 128, 128, 8
    $region5: #{tpu_custom_call.1} parent=1 // pred_fallthru
      _
    // Predicated region
    $region6: #{tpu_custom_call.1} parent=1 // pred_check
      _
    $region7: #{tpu_custom_call.1} parent=1 // pred_check_branch
      %22 = sbr.rel (0) target = $region9
    $region8: #{tpu_custom_call.1} parent=1 // pred_region
      _
    $region9: #{tpu_custom_call.1} parent=1 // pred_fallthru
      _
    // Predicated region
    $region10: #{tpu_custom_call.1} parent=1 // pred_check
      _
    $region11: #{tpu_custom_call.1} parent=1 // pred_check_branch
      %24 = sbr.rel (0) target = $region13
    $region12: #{tpu_custom_call.1} parent=1 // pred_region
      %25 = dma.done [#allocation3], 256
    $region13: #{tpu_custom_call.1} parent=1 // pred_fallthru
      _
    %v26 = vld [vmem:[#allocation2] sm:$0xff]
    %v27 = vld [vmem:[#allocation2 + $0x8] sm:$0xff]
    %v28 = vld [vmem:[%s1] sm:$0x1]
    %v29 = vmul.f32 %v26, 0.5
    %v30 = vmul.f32 %v27, 0.5
    %v31 = vtanh.pop %v29
    %v32 = vtanh.pop %v30
    %v33 = vadd.f32 %v31, 1.0
    %v34 = vadd.f32 %v32, 1.0
    %v35 = vmul.f32 %v29, %v33
    %v36 = vmul.f32 %v30, %v34
    %v38 = vlaneseq
    %v39 = vshrl.u32 %v38, 7
    %v40 = vsub.s32 0, %v39
    %v41 = vrot.slane %v28, %v40
    %v43 = vmul.f32 %v35, %v41
    %v44 = vmul.f32 %v36, %v41
    %45 = vst [vmem:[#allocation5] sm:$0xff] %v43
    %46 = vst [vmem:[#allocation5 + $0x8] sm:$0xff] %v44
    // Predicated region
    $region14: #{tpu_custom_call.1} parent=1 // pred_check
      _
    $region15: #{tpu_custom_call.1} parent=1 // pred_check_branch
      %48 = sbr.rel (0) target = $region17
    $region16: #{tpu_custom_call.1} parent=1 // pred_region
      %s50 = ssub.s32 256, 256
      %51 = vsyncadd [#allocation4], %s50
      %s52 = sshll.u32 [#allocation5], 4
      %s53 = int_to_ptr.vmem [resolvable:$true] %s52
      %58 = dma.vmem_to_hbm [thread:$0]  %s53, 256, %s2, [#allocation4], 128, 128, 8
    $region17: #{tpu_custom_call.1} parent=1 // pred_fallthru
      _
    // Predicated region
    $region18: #{tpu_custom_call.1} parent=1 // pred_check
      _
    $region19: #{tpu_custom_call.1} parent=1 // pred_check_branch
      %60 = sbr.rel (0) target = $region21
    $region20: #{tpu_custom_call.1} parent=1 // pred_region
      %61 = dma.done [#allocation4], 256
    $region21: #{tpu_custom_call.1} parent=1 // pred_fallthru
      _
    %62 = vsyncpa [#allocation3], 1
    %63 = vsyncpa [#allocation4], 1

</llo_original>
